<compile_context>
chip_gen: v7x
topology: tpu7x:2x2x1
jax: 0.10.0
libtpu: 0.0.40
codegen_flags: <defaults>
</compile_context>

<pallas_src>
import functools

import jax
import jax.numpy as jnp
from jax.experimental import pallas as pl
from jax.experimental.pallas import tpu as pltpu


def _round_up(x, m):
    return (x + m - 1) // m * m


def _choose_tf(f_pad, tb, target_bytes=8 * 1024 * 1024):
    """Largest tf (multiple of 128 dividing f_pad) with tb*tf*4 <= target."""
    n128 = f_pad // 128
    best = 1
    for d in range(1, n128 + 1):
        if n128 % d == 0 and tb * d * 128 * 4 <= target_bytes:
            best = d
    return best * 128


def _lwen_kernel(x_ref, w_ref, b_ref, t_ref, pred_ref, le_ref, acc_ref):
    # x_ref:    [tb, tf] f32  natural [B, F] layout (B on sublanes, F on lanes)
    # w_ref:    [1, tf]  f32  lane-dense linear-head weight row
    # b_ref:    [1, 1]   f32  bias (SMEM)
    # t_ref:    [tb, 1]  f32  ground-truth weights
    # pred_ref: [tb, 1]  f32  predicted weights (output)
    # le_ref:   [tb, 1]  f32  per-sample Huber terms (output)
    # acc_ref:  [tb, 1]  f32  VMEM scratch accumulator (persists over F axis)
    k = pl.program_id(1)

    @pl.when(k == 0)
    def _init():
        acc_ref[...] = jnp.zeros_like(acc_ref)

    # VPU multiply (sublane broadcast of the weight row) + cross-lane XLU
    # reduction; both are free slots while the kernel is HBM-bound on x.
    acc_ref[...] += jnp.sum(x_ref[...] * w_ref[...], axis=1, keepdims=True)

    @pl.when(k == pl.num_programs(1) - 1)
    def _finalize():
        pred = acc_ref[...] + b_ref[0, 0]          # [tb, 1] f32
        pred_ref[...] = pred
        # SmoothL1 (beta=1): 0.5*d^2 if |d|<1 else |d|-0.5, per sample.
        d = t_ref[...] - pred
        ad = jnp.abs(d)
        le_ref[...] = jnp.where(ad < 1.0, 0.5 * d * d, ad - 0.5)


@functools.partial(jax.jit, static_argnames=("tb", "tf"))
def lwen_forward_pallas(x_flat, w, b, target, *, tb=None, tf=None):
    """Fused (linear head + SmoothL1 per-sample terms) Pallas kernel.

    x_flat: [B, F] features (any float dtype), w: [F, 1], b: scalar,
    target: [B].  Returns (predict_weights [B, 1] f32, w_loss scalar f32).
    """
    B, F = x_flat.shape

    # Pad F only to the 128-lane granule (no tile-multiple padding).
    F_pad = _round_up(F, 128)

    # Tile policy: tb = B by default (contiguous DMA rows, single grid block
    # on the B axis — right call on single-TC v5e/v6e); tf is a divisor of
    # F_pad targeting ~8 MiB of x per step.
    if tb is None:
        tb = B
    assert B % tb == 0 and (tb == B or tb % 8 == 0), "tb must divide B (mult of 8)"
    nb = B // tb

    if tf is None:
        tf = _choose_tf(F_pad, tb)
    assert tf % 128 == 0 and F_pad % tf == 0, "tf must be a 128-mult divisor of F_pad"
    nf = F_pad // tf

    # No transpose, no bf16 cast. Pad x only if F is lane-misaligned
    # (one cheap pad pass in that case; zero-padded lanes meet zero weights).
    x_p = x_flat.astype(jnp.float32)
    if F_pad != F:
        x_p = jnp.pad(x_p, ((0, 0), (0, F_pad - F)))
    w_row = jnp.zeros((1, F_pad), jnp.float32).at[:, :F].set(
        w.reshape(1, F).astype(jnp.float32))
    t_col = target.reshape(B, 1).astype(jnp.float32)
    b_sc = jnp.asarray(b, jnp.float32).reshape(1, 1)

    pred, le = pl.pallas_call(
        _lwen_kernel,
        out_shape=(
            jax.ShapeDtypeStruct((B, 1), jnp.float32),   # predictions
            jax.ShapeDtypeStruct((B, 1), jnp.float32),   # per-sample Huber
        ),
        grid=(nb, nf),
        in_specs=[
            pl.BlockSpec((tb, tf), lambda i, k: (i, k)),          # x, natural layout
            pl.BlockSpec((1, tf), lambda i, k: (0, k)),           # w, lane-dense row
            pl.BlockSpec(memory_space=pltpu.MemorySpace.SMEM),    # bias scalar
            pl.BlockSpec((tb, 1), lambda i, k: (i, 0)),           # targets
        ],
        out_specs=(
            pl.BlockSpec((tb, 1), lambda i, k: (i, 0)),
            pl.BlockSpec((tb, 1), lambda i, k: (i, 0)),
        ),
        scratch_shapes=[pltpu.VMEM((tb, 1), jnp.float32)],
        compiler_params=pltpu.CompilerParams(
            # B axis parallel (megacore / v7x), F reduction axis last.
            dimension_semantics=("parallel", "arbitrary"),
            # 2 x 8 MiB double-buffered x tiles + small w/outputs fit easily;
            # safe on v5e/v6e/v7x scoped-VMEM budgets.
            vmem_limit_bytes=32 * 1024 * 1024,
        ),
    )(x_p, w_row, b_sc, t_col)

    # reduction='mean' over the true batch (no B padding with tb = B).
    w_loss = jnp.mean(le[:, 0])
    return pred, w_loss


class NetworkWrapperPallas:
    """JAX/Pallas equivalent of LWEN's NetworkWrapper."""

    def __init__(self, input_mode, w, b, tb=None, tf=None):
        self.mode = input_mode
        self.w = w          # [F, 1] linear-head weights
        self.b = b          # scalar bias
        self.tb = tb
        self.tf = tf

    def forward(self, batch):
        x = batch[self.mode]                                  # NCHW [B, C, H, W]
        B = x.shape[0]
        x_flat = x.reshape(B, -1)
        target = batch['weight'].reshape(B)

        predict_weights, w_loss = lwen_forward_pallas(
            x_flat, self.w, self.b, target, tb=self.tb, tf=self.tf)

        scalar_stats = {}
        loss = 0.0
        scalar_stats.update({'w_loss': w_loss})
        loss = loss + w_loss
        image_stats = {}
        output = {
            'predict_weights': predict_weights,
            'true_weights': batch['weight'],
            'catids': batch['cls_id'],
        }
        return output, loss, scalar_stats, image_stats


if __name__ == "__main__":
    key = jax.random.PRNGKey(0)
    k_x, k_w, k_t = jax.random.split(key, 3)

    # Small shapes consistent with an image->weight regression net.
    B, C, H, W = 8, 4, 16, 16
    F = C * H * W  # 1024

    x = jax.random.normal(k_x, (B, C, H, W), dtype=jnp.float32)              # batch['image']
    true_weight = jax.random.uniform(k_t, (B, 1), dtype=jnp.float32) * 10.0  # batch['weight']
    cls_id = jnp.arange(B, dtype=jnp.int32)                                  # batch['cls_id']

    # Deterministic synthetic net parameters.
    w_param = jax.random.normal(k_w, (F, 1), dtype=jnp.float32) * 0.02
    b_param = jnp.float32(0.0)

    batch = {'image': x, 'weight': true_weight, 'cls_id': cls_id}

    # tf=512 -> two F-reduction steps, exercising the accumulator/pl.when path.
    wrapper = NetworkWrapperPallas(input_mode='image', w=w_param, b=b_param, tf=512)
    output, loss, scalar_stats, image_stats = wrapper.forward(batch)

    jax.block_until_ready(output['predict_weights'])
    jax.block_until_ready(loss)

    # Pure-JAX f32 reference of the same math (linear head + SmoothL1 mean).
    x_flat = x.reshape(B, -1)
    pred_ref = x_flat @ w_param + b_param          # [B, 1]
    d = true_weight - pred_ref
    ad = jnp.abs(d)
    loss_ref = jnp.mean(jnp.where(ad < 1.0, 0.5 * d * d, ad - 0.5))

    assert jnp.allclose(output['predict_weights'], pred_ref, atol=1e-4, rtol=1e-4)
    assert jnp.allclose(loss, loss_ref, atol=1e-4, rtol=1e-4)
    assert output['catids'].shape == (B,)

    print("KERNEL_OK")
</pallas_src>

<mosaic_0001>
module attributes {stable_mosaic.version = 11 : i64} {
  func.func @_lwen_kernel(%arg0: i32, %arg1: i32, %arg2: memref<8x512xf32, #tpu.memory_space<vmem>>, %arg3: memref<1x512xf32, #tpu.memory_space<vmem>>, %arg4: memref<1x1xf32, #tpu.memory_space<smem>>, %arg5: memref<8x1xf32, #tpu.memory_space<vmem>>, %arg6: memref<8x1xf32, #tpu.memory_space<vmem>>, %arg7: memref<8x1xf32, #tpu.memory_space<vmem>>, %arg8: memref<8x1xf32, #tpu.memory_space<vmem>>) attributes {dimension_semantics = [#tpu.dimension_semantics<parallel>, #tpu.dimension_semantics<arbitrary>], iteration_bounds = array<i64: 1, 2>, scalar_prefetch = 0 : i64, scratch_operands = 1 : i64, tpu.core_type = #tpu.core_type<tc>, window_params = [{transform_indices = @transform_0, window_bounds = array<i64: 8, 512>}, {transform_indices = @transform_1, window_bounds = array<i64: 1, 512>}, {transform_indices = @transform_2, window_bounds = array<i64: 1, 1>}, {transform_indices = @transform_3, window_bounds = array<i64: 8, 1>}, {transform_indices = @transform_4, window_bounds = array<i64: 8, 1>}, {transform_indices = @transform_5, window_bounds = array<i64: 8, 1>}]} {
    %c0_i32 = arith.constant 0 : i32
    %0 = arith.cmpi eq, %arg1, %c0_i32 : i32
    %1 = arith.extui %0 : i1 to i32
    %c0_i32_0 = arith.constant 0 : i32
    %2 = arith.cmpi ne, %1, %c0_i32_0 : i32
    scf.if %2 {
      %cst_9 = arith.constant 0.000000e+00 : f32
      %15 = vector.broadcast %cst_9 : f32 to vector<8x1xf32>
      %c0_10 = arith.constant 0 : index
      %c0_11 = arith.constant 0 : index
      %16 = vector.load %arg8[%c0_10, %c0_11] : memref<8x1xf32, #tpu.memory_space<vmem>>, vector<8x1xf32>
      tpu.vector_store %arg8[%c0_10, %c0_11], %15 {strides = array<i32>} : memref<8x1xf32, #tpu.memory_space<vmem>>, vector<8x1xf32>,
    } else {
    }
    %c0 = arith.constant 0 : index
    %c0_1 = arith.constant 0 : index
    %3 = vector.load %arg8[%c0, %c0_1] : memref<8x1xf32, #tpu.memory_space<vmem>>, vector<8x1xf32>
    %c0_2 = arith.constant 0 : index
    %c0_3 = arith.constant 0 : index
    %4 = vector.load %arg2[%c0_2, %c0_3] : memref<8x512xf32, #tpu.memory_space<vmem>>, vector<8x512xf32>
    %c0_4 = arith.constant 0 : index
    %c0_5 = arith.constant 0 : index
    %5 = vector.load %arg3[%c0_4, %c0_5] : memref<1x512xf32, #tpu.memory_space<vmem>>, vector<1x512xf32>
    %6 = vector.broadcast %5 : vector<1x512xf32> to vector<8x512xf32>
    %7 = arith.mulf %4, %6 : vector<8x512xf32>
    %cst = arith.constant dense<0.000000e+00> : vector<8xf32>
    %8 = vector.multi_reduction <add>, %7, %cst [1] : vector<8x512xf32> to vector<8xf32>
    %9 = vector.shape_cast %8 : vector<8xf32> to vector<8x1xf32>
    %10 = arith.addf %3, %9 : vector<8x1xf32>
    %c0_6 = arith.constant 0 : index
    %c0_7 = arith.constant 0 : index
    %11 = vector.load %arg8[%c0_6, %c0_7] : memref<8x1xf32, #tpu.memory_space<vmem>>, vector<8x1xf32>
    tpu.vector_store %arg8[%c0_6, %c0_7], %10 {strides = array<i32>} : memref<8x1xf32, #tpu.memory_space<vmem>>, vector<8x1xf32>,
    %c1_i32 = arith.constant 1 : i32
    %12 = arith.cmpi eq, %arg1, %c1_i32 : i32
    %13 = arith.extui %12 : i1 to i32
    %c0_i32_8 = arith.constant 0 : i32
    %14 = arith.cmpi ne, %13, %c0_i32_8 : i32
    scf.if %14 {
      %c0_9 = arith.constant 0 : index
      %c0_10 = arith.constant 0 : index
      %15 = vector.load %arg8[%c0_9, %c0_10] : memref<8x1xf32, #tpu.memory_space<vmem>>, vector<8x1xf32>
      %c0_11 = arith.constant 0 : index
      %c0_12 = arith.constant 0 : index
      %16 = memref.load %arg4[%c0_11, %c0_12] : memref<1x1xf32, #tpu.memory_space<smem>>
      %17 = vector.broadcast %16 : f32 to vector<8x1xf32>
      %18 = arith.addf %15, %17 : vector<8x1xf32>
      %c0_13 = arith.constant 0 : index
      %c0_14 = arith.constant 0 : index
      %19 = vector.load %arg6[%c0_13, %c0_14] : memref<8x1xf32, #tpu.memory_space<vmem>>, vector<8x1xf32>
      tpu.vector_store %arg6[%c0_13, %c0_14], %18 {strides = array<i32>} : memref<8x1xf32, #tpu.memory_space<vmem>>, vector<8x1xf32>,
      %c0_15 = arith.constant 0 : index
      %c0_16 = arith.constant 0 : index
      %20 = vector.load %arg5[%c0_15, %c0_16] : memref<8x1xf32, #tpu.memory_space<vmem>>, vector<8x1xf32>
      %21 = arith.subf %20, %18 : vector<8x1xf32>
      %22 = math.absf %21 : vector<8x1xf32>
      %cst_17 = arith.constant 1.000000e+00 : f32
      %23 = vector.broadcast %cst_17 : f32 to vector<8x1xf32>
      %24 = arith.cmpf olt, %22, %23 : vector<8x1xf32>
      %cst_18 = arith.constant 5.000000e-01 : f32
      %25 = vector.broadcast %cst_18 : f32 to vector<8x1xf32>
      %26 = arith.mulf %25, %21 : vector<8x1xf32>
      %27 = arith.mulf %26, %21 : vector<8x1xf32>
      %cst_19 = arith.constant 5.000000e-01 : f32
      %28 = vector.broadcast %cst_19 : f32 to vector<8x1xf32>
      %29 = arith.subf %22, %28 : vector<8x1xf32>
      %30 = arith.select %24, %27, %29 : vector<8x1xi1>, vector<8x1xf32>
      %c0_20 = arith.constant 0 : index
      %c0_21 = arith.constant 0 : index
      %31 = vector.load %arg7[%c0_20, %c0_21] : memref<8x1xf32, #tpu.memory_space<vmem>>, vector<8x1xf32>
      tpu.vector_store %arg7[%c0_20, %c0_21], %30 {strides = array<i32>} : memref<8x1xf32, #tpu.memory_space<vmem>>, vector<8x1xf32>,
    } else {
    }
    return
  }
  func.func @transform_0(%arg0: i32, %arg1: i32) -> (i32, i32) {
    %c0_i32 = arith.constant 0 : i32
    return %arg0, %arg1 : i32, i32
  }
  func.func @transform_1(%arg0: i32, %arg1: i32) -> (i32, i32) {
    %c0_i32 = arith.constant 0 : i32
    %c0_i32_0 = arith.constant 0 : i32
    return %c0_i32, %arg1 : i32, i32
  }
  func.func @transform_2(%arg0: i32, %arg1: i32) -> (i32, i32) {
    %c0_i32 = arith.constant 0 : i32
    %c0_i32_0 = arith.constant 0 : i32
    %c0_i32_1 = arith.constant 0 : i32
    return %c0_i32, %c0_i32_0 : i32, i32
  }
  func.func @transform_3(%arg0: i32, %arg1: i32) -> (i32, i32) {
    %c0_i32 = arith.constant 0 : i32
    %c0_i32_0 = arith.constant 0 : i32
    return %arg0, %c0_i32 : i32, i32
  }
  func.func @transform_4(%arg0: i32, %arg1: i32) -> (i32, i32) {
    %c0_i32 = arith.constant 0 : i32
    %c0_i32_0 = arith.constant 0 : i32
    return %arg0, %c0_i32 : i32, i32
  }
  func.func @transform_5(%arg0: i32, %arg1: i32) -> (i32, i32) {
    %c0_i32 = arith.constant 0 : i32
    %c0_i32_0 = arith.constant 0 : i32
    return %arg0, %c0_i32 : i32, i32
  }
}

</mosaic_0001>

<llo_original>
// kernel: lwen_forward_pallas.1
$region0: #{lwen_forward_pallas.1}
  #allocation0 [shape = 'u32[]', space=smem, size = 0x4, offset = 0x4, fixed_abs, tag = 'smem constant byte address 0x4 - core index']
  #allocation1 [shape = 'u32[144,128]{1,0:T(1,128)}', space=vmem, size = 0x12000, scoped, tag = 'internal scratch']
  #allocation2 [shape = 'f32[8,1]{1,0:T(8,128)}', space=vmem, size = 0x1000, scoped, tag = 'scratch operand']
  #allocation3 [shape = 'f32[1,1]{1,0:T(1,128)S(6)}', space=smem, size = 0x200, scoped, tag = 'scoped memory for lwen_forward_pallas.1']
  %s0 = inlined_call_operand.hbm [shape: f32[8,1024], index: 0, kind: input, shape index: {}]
  %s1 = inlined_call_operand.vmem [shape: f32[1,1024], index: 1, kind: input, shape index: {}]
  %s2 = inlined_call_operand.<no memory space> [shape: f32[1,1], index: 2, kind: input, shape index: {}]
  %s3 = inlined_call_operand.vmem [shape: f32[8,1], index: 3, kind: input, shape index: {}]
  %s4 = inlined_call_operand.vmem [shape: f32[8,1], index: 4, kind: output, shape index: {0}]
  %s5 = inlined_call_operand.vmem [shape: f32[8,1], index: 5, kind: output, shape index: {1}]
  %6 = xla_tuple %s4, %s5
  %s7 = sld [smem:[#allocation0]]
  $region69: #{lwen_forward_pallas.1} parent=0
    _
  %s9 = ssub.s32 1, %s7
  %s10 = scalar_select 0, %s9, %s7
  %11 = sst [smem:[#allocation3]] %s2
  $region1: #{lwen_forward_pallas.1} parent=0
    #allocation4 [shape = 'u8[32768]{0}', space=vmem, size = 0x8000, scoped, tag = 'input window, operand 0']
    #allocation5 [shape = 's32[2]{0}', space=sflag, size = 0x8, scoped, tag = 'scoped memory for lwen_forward_pallas.1']
    %12 = vsyncpa [#allocation5], 0
    %s13 = scalar_lea.sflag [#allocation5], 1
    %14 = vsyncpa %s13, 0
    loop: start=0, step=1, limit=4
    $region2: #{lwen_forward_pallas.1} parent=1 // loop_pre_header
      _
    $region3: #{lwen_forward_pallas.1} parent=1 // loop_header
      %s16 = sphi 0, %s20
      %p17 = scmp.ge.s32.totalorder %s16, 4
      %s23 = sphi 0, %s35
      %s24 = sphi 0, %s31
      %s25 = sphi 0, %s23
      %s26 = sphi 0, %s24
      %s27 = sphi 0, %s25
      %s28 = sphi 0, %s26
      %s40 = sphi 0, %s42
      %s43 = sphi 0, %s40
      %s44 = sphi 0, %s43
      %s60 = sphi 0, %s44
      %s66 = sphi 0, %s68
      %s69 = sphi 0, %s66
      %s70 = sphi 0, %s69
      %s86 = sphi 0, %s70
      %s90 = sphi 0, %s90
      %s92 = sphi 0, %s90
      %s93 = sphi 0, %s92
      %s107 = sphi 0, %s93
      %s113 = sphi 0, %s115
      %s116 = sphi 0, %s113
      %s117 = sphi 0, %s116
      %s133 = sphi 0, %s117
      %s139 = sphi 0, %s141
      %s142 = sphi 0, %s139
      %s143 = sphi 0, %s142
      %s159 = sphi 0, %s143
      %s165 = sphi 0, %s167
      %s168 = sphi 0, %s165
      %s169 = sphi 0, %s168
      %s185 = sphi 0, %s169
    $region4: #{lwen_forward_pallas.1} parent=1 // loop_header_branch
      %19 = sbr.rel (%p17) target = $region8
    $region5: #{lwen_forward_pallas.1} parent=1 // loop_body
      %s21 = ssub.s32 %s16, 1
      %s22 = ssub.s32 %s16, 2
      %s29 = sadd.s32 1, %s24
      %p30 = scmp.ge.s32.totalorder %s29, 2
      %s31 = scalar_select %p30, 0, %s29
      %s32 = sadd.s32 1, %s23
      %s33 = scalar_select %p30, %s32, %s23
      %p34 = scmp.ge.s32.totalorder %s33, 1
      %s35 = scalar_select %p34, 0, %s33
      %s36 = ssub.s32 %s23, %s35
      %s37 = ssub.s32 %s24, %s31
      %s38 = sor.u32 %s36, %s37
      %p39 = scmp.eq.s32.totalorder %s38, 0
      %s41 = sadd.s32 %s40, 1
      %s42 = scalar_select %p39, %s40, %s41
      %p45 = pneg %p39
      %p46 = scmp.eq.s32.totalorder %s16, 1
      %p47 = por %p45, %p46
      %p48 = scmp.ne.s32.totalorder %s40, %s43
      %p49 = scmp.eq.s32.totalorder %s16, 0
      %p50 = por %p48, %p49
      %p51 = scmp.ne.s32.totalorder %s40, %s43
      %p52 = scmp.eq.s32.totalorder %s21, 1
      %p53 = por %p51, %p52
      %p54 = scmp.ne.s32.totalorder %s43, %s44
      %p55 = scmp.eq.s32.totalorder %s21, 0
      %p56 = por %p54, %p55
      %p57 = scmp.ne.s32.totalorder %s43, %s44
      %p58 = scmp.eq.s32.totalorder %s22, 1
      %p59 = por %p57, %p58
      %p61 = scmp.ne.s32.totalorder %s44, %s60
      %p62 = scmp.eq.s32.totalorder %s22, 0
      %p63 = por %p61, %p62
      %s64 = ssub.s32 %s24, %s31
      %p65 = scmp.eq.s32.totalorder %s64, 0
      %s67 = sadd.s32 %s66, 1
      %s68 = scalar_select %p65, %s66, %s67
      %p71 = pneg %p65
      %p72 = scmp.eq.s32.totalorder %s16, 1
      %p73 = por %p71, %p72
      %p74 = scmp.ne.s32.totalorder %s66, %s69
      %p75 = scmp.eq.s32.totalorder %s16, 0
      %p76 = por %p74, %p75
      %p77 = scmp.ne.s32.totalorder %s66, %s69
      %p78 = scmp.eq.s32.totalorder %s21, 1
      %p79 = por %p77, %p78
      %p80 = scmp.ne.s32.totalorder %s69, %s70
      %p81 = scmp.eq.s32.totalorder %s21, 0
      %p82 = por %p80, %p81
      %p83 = scmp.ne.s32.totalorder %s69, %s70
      %p84 = scmp.eq.s32.totalorder %s22, 1
      %p85 = por %p83, %p84
      %p87 = scmp.ne.s32.totalorder %s70, %s86
      %p88 = scmp.eq.s32.totalorder %s22, 0
      %p89 = por %p87, %p88
      %s91 = sadd.s32 %s90, 1
      %p94 = scmp.eq.s32.totalorder %s16, 1
      %p95 = scmp.ne.s32.totalorder %s90, %s92
      %p96 = scmp.eq.s32.totalorder %s16, 0
      %p97 = por %p95, %p96
      %p98 = scmp.ne.s32.totalorder %s90, %s92
      %p99 = scmp.eq.s32.totalorder %s21, 1
      %p100 = por %p98, %p99
      %p101 = scmp.ne.s32.totalorder %s92, %s93
      %p102 = scmp.eq.s32.totalorder %s21, 0
      %p103 = por %p101, %p102
      %p104 = scmp.ne.s32.totalorder %s92, %s93
      %p105 = scmp.eq.s32.totalorder %s22, 1
      %p106 = por %p104, %p105
      %p108 = scmp.ne.s32.totalorder %s93, %s107
      %p109 = scmp.eq.s32.totalorder %s22, 0
      %p110 = por %p108, %p109
      %s111 = ssub.s32 %s23, %s35
      %p112 = scmp.eq.s32.totalorder %s111, 0
      %s114 = sadd.s32 %s113, 1
      %s115 = scalar_select %p112, %s113, %s114
      %p118 = pneg %p112
      %p119 = scmp.eq.s32.totalorder %s16, 1
      %p120 = por %p118, %p119
      %p121 = scmp.ne.s32.totalorder %s113, %s116
      %p122 = scmp.eq.s32.totalorder %s16, 0
      %p123 = por %p121, %p122
      %p124 = scmp.ne.s32.totalorder %s113, %s116
      %p125 = scmp.eq.s32.totalorder %s21, 1
      %p126 = por %p124, %p125
      %p127 = scmp.ne.s32.totalorder %s116, %s117
      %p128 = scmp.eq.s32.totalorder %s21, 0
      %p129 = por %p127, %p128
      %p130 = scmp.ne.s32.totalorder %s116, %s117
      %p131 = scmp.eq.s32.totalorder %s22, 1
      %p132 = por %p130, %p131
      %p134 = scmp.ne.s32.totalorder %s117, %s133
      %p135 = scmp.eq.s32.totalorder %s22, 0
      %p136 = por %p134, %p135
      %s137 = ssub.s32 %s23, %s35
      %p138 = scmp.eq.s32.totalorder %s137, 0
      %s140 = sadd.s32 %s139, 1
      %s141 = scalar_select %p138, %s139, %s140
      %p144 = pneg %p138
      %p145 = scmp.eq.s32.totalorder %s16, 1
      %p146 = por %p144, %p145
      %p147 = scmp.ne.s32.totalorder %s139, %s142
      %p148 = scmp.eq.s32.totalorder %s16, 0
      %p149 = por %p147, %p148
      %p150 = scmp.ne.s32.totalorder %s139, %s142
      %p151 = scmp.eq.s32.totalorder %s21, 1
      %p152 = por %p150, %p151
      %p153 = scmp.ne.s32.totalorder %s142, %s143
      %p154 = scmp.eq.s32.totalorder %s21, 0
      %p155 = por %p153, %p154
      %p156 = scmp.ne.s32.totalorder %s142, %s143
      %p157 = scmp.eq.s32.totalorder %s22, 1
      %p158 = por %p156, %p157
      %p160 = scmp.ne.s32.totalorder %s143, %s159
      %p161 = scmp.eq.s32.totalorder %s22, 0
      %p162 = por %p160, %p161
      %s163 = ssub.s32 %s23, %s35
      %p164 = scmp.eq.s32.totalorder %s163, 0
      %s166 = sadd.s32 %s165, 1
      %s167 = scalar_select %p164, %s165, %s166
      %p170 = pneg %p164
      %p171 = scmp.eq.s32.totalorder %s16, 1
      %p172 = por %p170, %p171
      %p173 = scmp.ne.s32.totalorder %s165, %s168
      %p174 = scmp.eq.s32.totalorder %s16, 0
      %p175 = por %p173, %p174
      %p176 = scmp.ne.s32.totalorder %s165, %s168
      %p177 = scmp.eq.s32.totalorder %s21, 1
      %p178 = por %p176, %p177
      %p179 = scmp.ne.s32.totalorder %s168, %s169
      %p180 = scmp.eq.s32.totalorder %s21, 0
      %p181 = por %p179, %p180
      %p182 = scmp.ne.s32.totalorder %s168, %s169
      %p183 = scmp.eq.s32.totalorder %s22, 1
      %p184 = por %p182, %p183
      %p186 = scmp.ne.s32.totalorder %s169, %s185
      %p187 = scmp.eq.s32.totalorder %s22, 0
      %p188 = por %p186, %p187
      %p189 = scmp.le.s32.totalorder 1, %s16
      %p190 = scmp.lt.s32.totalorder %s16, 3
      %p191 = pnand %p189, %p190
      %p192 = pneg %p191
      // Predicated region
      $region9: #{lwen_forward_pallas.1} parent=5 // pred_check
        _
      $region10: #{lwen_forward_pallas.1} parent=5 // pred_check_branch
        %194 = sbr.rel (%p191) target = $region12
      $region11: #{lwen_forward_pallas.1} parent=5 // pred_region
        %s195 = ssub.s32 %s16, 1
        // Predicated region
        $region13: #{lwen_forward_pallas.1} parent=11 // pred_check
          %p196 = pneg %p103
        $region14: #{lwen_forward_pallas.1} parent=11 // pred_check_branch
          %198 = sbr.rel (%p196) target = $region16
        $region15: #{lwen_forward_pallas.1} parent=11 // pred_region
          _
        $region16: #{lwen_forward_pallas.1} parent=11 // pred_fallthru
          _
        // Predicated region
        $region17: #{lwen_forward_pallas.1} parent=11 // pred_check
          %p199 = pneg %p129
        $region18: #{lwen_forward_pallas.1} parent=11 // pred_check_branch
          %201 = sbr.rel (%p199) target = $region20
        $region19: #{lwen_forward_pallas.1} parent=11 // pred_region
          %p202 = scmp.lt.s32.totalorder %s25, 0
          %s203 = scalar_select %p202, %s25, 0
          %s204 = smul.addr %s203, 8
          %s205 = scalar_lea.vmem %s3, %s204
        $region20: #{lwen_forward_pallas.1} parent=11 // pred_fallthru
          _
      $region12: #{lwen_forward_pallas.1} parent=5 // pred_fallthru
        _
      %p206 = scmp.lt.s32.totalorder %s16, 2
      // Predicated region
      $region21: #{lwen_forward_pallas.1} parent=5 // pred_check
        %p207 = pneg %p206
      $region22: #{lwen_forward_pallas.1} parent=5 // pred_check_branch
        %209 = sbr.rel (%p207) target = $region24
      $region23: #{lwen_forward_pallas.1} parent=5 // pred_region
        // Predicated region
        $region25: #{lwen_forward_pallas.1} parent=23 // pred_check
          %p210 = pneg %p50
        $region26: #{lwen_forward_pallas.1} parent=23 // pred_check_branch
          %212 = sbr.rel (%p210) target = $region28
        $region27: #{lwen_forward_pallas.1} parent=23 // pred_region
          %s213 = sand.u32 %s40, 1
          %s214 = scalar_lea.sflag [#allocation5], %s213
          %s215 = sand.u32 %s40, 1
          %s216 = smul.addr %s215, 32
          %s217 = scalar_lea.vmem [#allocation4], %s216
          %s218 = smul.u32 4, %s24
          %s220 = ssub.s32 512, 512
          %221 = vsyncadd %s214, %s220
          %s222 = smul.addr %s23, 8
          %s223 = sadd.s32 %s218, %s222
          %s224 = smul.addr %s223, 128
          %s225 = scalar_lea.hbm %s0, %s224
          %s227 = sshll.u32 %s217, 4
          %s228 = int_to_ptr.vmem [resolvable:$true] %s227
          %230 = dma.hbm_to_vmem [thread:$0]  %s225, 512, %s228, %s214
        $region28: #{lwen_forward_pallas.1} parent=23 // pred_fallthru
          _
        // Predicated region
        $region29: #{lwen_forward_pallas.1} parent=23 // pred_check
          %p231 = pneg %p76
        $region30: #{lwen_forward_pallas.1} parent=23 // pred_check_branch
          %233 = sbr.rel (%p231) target = $region32
        $region31: #{lwen_forward_pallas.1} parent=23 // pred_region
          %s234 = smul.u32 4, %s24
          %p235 = scmp.lt.s32.totalorder %s234, 7
          %s236 = scalar_select %p235, %s234, 7
          %s237 = scalar_lea.vmem %s1, %s236
          %s238 = smul.u32 4, %s24
        $region32: #{lwen_forward_pallas.1} parent=23 // pred_fallthru
          _
      $region24: #{lwen_forward_pallas.1} parent=5 // pred_fallthru
        _
      %p239 = scmp.le.s32.totalorder 1, %s16
      %p240 = scmp.lt.s32.totalorder %s16, 3
      %p241 = pnand %p239, %p240
      %p242 = pneg %p241
      // Predicated region
      $region33: #{lwen_forward_pallas.1} parent=5 // pred_check
        _
      $region34: #{lwen_forward_pallas.1} parent=5 // pred_check_branch
        %244 = sbr.rel (%p241) target = $region36
      $region35: #{lwen_forward_pallas.1} parent=5 // pred_region
        %s245 = ssub.s32 %s16, 1
        %s246 = sand.u32 %s43, 1
        %s247 = scalar_lea.sflag [#allocation5], %s246
        %s248 = sand.u32 %s43, 1
        %s249 = smul.addr %s248, 32
        %s250 = scalar_lea.vmem [#allocation4], %s249
        // Predicated region
        $region37: #{lwen_forward_pallas.1} parent=35 // pred_check
          %p251 = pneg %p56
        $region38: #{lwen_forward_pallas.1} parent=35 // pred_check_branch
          %253 = sbr.rel (%p251) target = $region40
        $region39: #{lwen_forward_pallas.1} parent=35 // pred_region
          %254 = dma.done %s247, 512
        $region40: #{lwen_forward_pallas.1} parent=35 // pred_fallthru
          _
        %s255 = sand.u32 %s43, 1
        %s256 = scalar_lea.sflag [#allocation5], %s255
        %s257 = sand.u32 %s43, 1
        %s258 = smul.addr %s257, 32
        %s259 = scalar_lea.vmem [#allocation4], %s258
        %p260 = pneg %p56
        %p261 = pneg %p53
        %s262 = smul.u32 4, %s26
        %p263 = scmp.lt.s32.totalorder %s262, 7
        %s264 = scalar_select %p263, %s262, 7
        %s265 = scalar_lea.vmem %s1, %s264
        %p266 = pneg %p82
        %p267 = pneg %p79
        %p268 = pneg %p103
        %p269 = pneg %p100
        %p270 = scmp.lt.s32.totalorder %s25, 0
        %s271 = scalar_select %p270, %s25, 0
        %s272 = smul.addr %s271, 8
        %s273 = scalar_lea.vmem %s3, %s272
        %p274 = pneg %p129
        %p275 = pneg %p126
        %p276 = pneg %p155
        %p277 = pneg %p152
        %p278 = scmp.lt.s32.totalorder %s25, 0
        %s279 = scalar_select %p278, %s25, 0
        %s280 = smul.addr %s279, 8
        %s281 = scalar_lea.vmem %s4, %s280
        %p282 = pneg %p181
        %p283 = pneg %p178
        %p284 = scmp.lt.s32.totalorder %s25, 0
        %s285 = scalar_select %p284, %s25, 0
        %s286 = smul.addr %s285, 8
        %s287 = scalar_lea.vmem %s5, %s286
        %s288 = smul.u32 4, %s26
        %s289 = smul.u32 4, %s26
        %p290 = scmp.lt.s32.totalorder %s289, 7
        %s291 = scalar_select %p290, %s289, 7
        %s292 = scalar_lea.vmem %s1, %s291
        %s293 = smul.u32 4, %s26
        %p294 = scmp.lt.s32.totalorder %s25, 0
        %s295 = scalar_select %p294, %s25, 0
        %s296 = smul.addr %s295, 8
        %s297 = scalar_lea.vmem %s3, %s296
        %p298 = scmp.lt.s32.totalorder %s25, 0
        %s299 = scalar_select %p298, %s25, 0
        %s300 = smul.addr %s299, 8
        %s301 = scalar_lea.vmem %s4, %s300
        %p302 = scmp.lt.s32.totalorder %s25, 0
        %s303 = scalar_select %p302, %s25, 0
        %s304 = smul.addr %s303, 8
        %s305 = scalar_lea.vmem %s5, %s304
        %p306 = scmp.eq.s32.totalorder %s26, 0
        // Predicated region
        $region41: #{lwen_forward_pallas.1} parent=35 // pred_check
          %p307 = pneg %p306
        $region42: #{lwen_forward_pallas.1} parent=35 // pred_check_branch
          %309 = sbr.rel (%p307) target = $region44
        $region43: #{lwen_forward_pallas.1} parent=35 // pred_region
          %vm310 = vcmask 7168
          %311 = vst.msk [vmem:[#allocation2] sm:$0xff] %vm310, 0.0
        $region44: #{lwen_forward_pallas.1} parent=35 // pred_fallthru
          _
        %v312 = vld [vmem:[#allocation2] sm:$0xff]
        %v313 = vld [vmem:[%s250] sm:$0xff]
        %v314 = vld [vmem:[%s250 + $0x8] sm:$0xff]
        %v315 = vld [vmem:[%s250 + $0x10] sm:$0xff]
        %v316 = vld [vmem:[%s250 + $0x18] sm:$0xff]
        %v317 = vld [vmem:[%s292] sm:$0xf]
        %v319 = vlaneseq
        %v320 = vshrl.u32 %v319, 7
        %v321 = vsub.s32 0, %v320
        %v322 = vrot.slane %v317, %v321
        %v323 = vlaneseq
        %v324 = vshrl.u32 %v323, 7
        %v325 = vsub.s32 1, %v324
        %v326 = vrot.slane %v317, %v325
        %v327 = vlaneseq
        %v328 = vshrl.u32 %v327, 7
        %v329 = vsub.s32 2, %v328
        %v330 = vrot.slane %v317, %v329
        %v331 = vlaneseq
        %v332 = vshrl.u32 %v331, 7
        %v333 = vsub.s32 3, %v332
        %v334 = vrot.slane %v317, %v333
        %v339 = vmul.f32 %v313, %v322
        %v340 = vmul.f32 %v314, %v326
        %v341 = vmul.f32 %v315, %v330
        %v342 = vmul.f32 %v316, %v334
        %v343 = vadd.f32 %v339, %v340
        %v344 = vadd.f32 %v343, %v341
        %v345 = vadd.f32 %v344, %v342
        %346 = vadd.xlane.f32.xlu0 %v345
        %v347 = vpop.xlane.xlu0 %346
        %v348 = vadd.f32 %v312, %v347
        %vm349 = vcmask 7168
        %350 = vst.msk [vmem:[#allocation2] sm:$0xff] %vm349, %v348
        %p351 = scmp.eq.s32.totalorder %s26, 1
        // Predicated region
        $region45: #{lwen_forward_pallas.1} parent=35 // pred_check
          %p352 = pneg %p351
        $region46: #{lwen_forward_pallas.1} parent=35 // pred_check_branch
          %354 = sbr.rel (%p352) target = $region48
        $region47: #{lwen_forward_pallas.1} parent=35 // pred_region
          %v355 = vld [vmem:[#allocation2] sm:$0xff]
          %s356 = sld [smem:[#allocation3]]
          %v357 = vstv %s356
          %v358 = vadd.f32 %v355, %v357
          %359 = vst.msk [vmem:[%s301] sm:$0xff] %vm349, %v358
          %v360 = vld [vmem:[%s297] sm:$0xff]
          %v361 = vsub.f32 %v360, %v358
          %v362 = vand.u32 2147483647, %v361
          %vm363 = vcmp.lt.f32.partialorder %v362, 1.0
          %v364 = vmul.f32 %v361, 0.5
          %v365 = vmul.f32 %v364, %v361
          %v366 = vsub.f32 %v362, 0.5
          %v367 = vsel %vm363, %v365, %v366
          %368 = vst.msk [vmem:[%s305] sm:$0xff] %vm349, %v367
        $region48: #{lwen_forward_pallas.1} parent=35 // pred_fallthru
          _
        %p369 = scmp.lt.s32.totalorder %s25, 0
        %s370 = scalar_select %p369, %s25, 0
        %s371 = smul.addr %s370, 8
        %s372 = scalar_lea.vmem %s4, %s371
        %p373 = scmp.lt.s32.totalorder %s25, 0
        %s374 = scalar_select %p373, %s25, 0
        %s375 = smul.addr %s374, 8
        %s376 = scalar_lea.vmem %s5, %s375
        // Predicated region
        $region49: #{lwen_forward_pallas.1} parent=35 // pred_check
          %p377 = pneg %p152
        $region50: #{lwen_forward_pallas.1} parent=35 // pred_check_branch
          %379 = sbr.rel (%p377) target = $region52
        $region51: #{lwen_forward_pallas.1} parent=35 // pred_region
          _
        $region52: #{lwen_forward_pallas.1} parent=35 // pred_fallthru
          _
        // Predicated region
        $region53: #{lwen_forward_pallas.1} parent=35 // pred_check
          %p380 = pneg %p178
        $region54: #{lwen_forward_pallas.1} parent=35 // pred_check_branch
          %382 = sbr.rel (%p380) target = $region56
        $region55: #{lwen_forward_pallas.1} parent=35 // pred_region
          _
        $region56: #{lwen_forward_pallas.1} parent=35 // pred_fallthru
          _
        // Predicated region
        $region57: #{lwen_forward_pallas.1} parent=35 // pred_check
          %p383 = pneg %p152
        $region58: #{lwen_forward_pallas.1} parent=35 // pred_check_branch
          %385 = sbr.rel (%p383) target = $region60
        $region59: #{lwen_forward_pallas.1} parent=35 // pred_region
          %p386 = scmp.lt.s32.totalorder %s25, 0
          %s387 = scalar_select %p386, %s25, 0
          %s388 = smul.addr %s387, 8
          %s389 = scalar_lea.vmem %s4, %s388
        $region60: #{lwen_forward_pallas.1} parent=35 // pred_fallthru
          _
        // Predicated region
        $region61: #{lwen_forward_pallas.1} parent=35 // pred_check
          %p390 = pneg %p178
        $region62: #{lwen_forward_pallas.1} parent=35 // pred_check_branch
          %392 = sbr.rel (%p390) target = $region64
        $region63: #{lwen_forward_pallas.1} parent=35 // pred_region
          %p393 = scmp.lt.s32.totalorder %s25, 0
          %s394 = scalar_select %p393, %s25, 0
          %s395 = smul.addr %s394, 8
          %s396 = scalar_lea.vmem %s5, %s395
        $region64: #{lwen_forward_pallas.1} parent=35 // pred_fallthru
          _
      $region36: #{lwen_forward_pallas.1} parent=5 // pred_fallthru
        _
      %p397 = scmp.le.s32.totalorder 2, %s16
      // Predicated region
      $region65: #{lwen_forward_pallas.1} parent=5 // pred_check
        %p398 = pneg %p397
      $region66: #{lwen_forward_pallas.1} parent=5 // pred_check_branch
        %400 = sbr.rel (%p398) target = $region68
      $region67: #{lwen_forward_pallas.1} parent=5 // pred_region
        %s401 = ssub.s32 %s16, 2
      $region68: #{lwen_forward_pallas.1} parent=5 // pred_fallthru
        _
    $region6: #{lwen_forward_pallas.1} parent=1 // loop_footer
      %s20 = sadd.s32 1, %s16
    $region7: #{lwen_forward_pallas.1} parent=1 // loop_footer_branch
      %15 = sbr.rel target = $region3
    $region8: #{lwen_forward_pallas.1} parent=1 // loop_exit
      _
    %402 = vsyncpa [#allocation5], 1
    %s403 = scalar_lea.sflag [#allocation5], 1
    %404 = vsyncpa %s403, 1

</llo_original>
